<compile_context>
chip_gen: v6e
topology: v6e:2x2x1
jax: 0.10.0
libtpu: 0.0.40
codegen_flags: <defaults>
</compile_context>

<pallas_src>
import functools

import jax
import jax.numpy as jnp
from jax import lax
from jax.experimental import pallas as pl
from jax.experimental.pallas import tpu as pltpu


def _ce_kernel(x_ref, t_ref, out_ref, *, epsilon, n_valid, inner_tiles, tile_n):
    s = pl.program_id(0)   # batch split (parallel -> both TCs on v7x)
    i = pl.program_id(1)   # batch tiles within the split (arbitrary, carried out block)

    @pl.when(i == 0)
    def _():
        out_ref[...] = jnp.zeros_like(out_ref)

    x = x_ref[...]                          # (TN, C) in the streamed HBM dtype
    t = t_ref[...]                          # (TN, 1) int32
    n_classes = x.shape[-1]

    # Row-wise log-sum-exp.  max is exact in the input dtype; upcast to f32
    # only inside the exp path so no full (TN, C) f32 copy is bound.
    m = jnp.max(x, axis=-1, keepdims=True).astype(jnp.float32)        # (TN, 1)
    sum_exp = jnp.sum(jnp.exp(x.astype(jnp.float32) - m),
                      axis=-1, keepdims=True)                          # (TN, 1)
    lse = m + jnp.log(sum_exp)                                         # (TN, 1)

    # Fused smoothing reduction:
    #   loss_row = (1-eps)*(lse - x[t]) + eps*(lse - mean(x))
    #            = lse - sum_j w_j * x_j,  w_j = eps/C + (1-eps)*[j == t]
    off_w = epsilon / n_classes
    on_w = 1.0 - epsilon + off_w
    lane = lax.broadcasted_iota(jnp.int32, x.shape, 1)
    w = jnp.where(lane == t, on_w, off_w)                              # (TN, C) f32
    weighted = jnp.sum(w * x.astype(jnp.float32), axis=-1, keepdims=True)

    per_row = lse - weighted                                           # (TN, 1)

    # Mask rows past the true batch (partial final block / split padding).
    # Keep this a select so garbage (NaN/Inf) from undefined rows can't leak.
    row = lax.broadcasted_iota(jnp.int32, (tile_n, 1), 0)
    global_row = (s * inner_tiles + i) * tile_n + row
    per_row = jnp.where(global_row < n_valid, per_row, 0.0)

    # Per-step scalar accumulation into the resident (1, 1) output block:
    # no lane-padded (TN, 1) scratch, no strided per-step acc load/add/store.
    out_ref[...] += jnp.sum(per_row, keepdims=True)


def _physical_vmem_bytes():
    try:
        v = getattr(pltpu.get_tpu_info(), "vmem_capacity_bytes", None)
        if v:
            return int(v)
    except Exception:
        pass
    return 64 << 20            # conservative default (v7x)


def _default_num_splits():
    # One batch split per TensorCore: 2 on v7x (and v4/v5p megacore), else 1.
    try:
        kind = jax.devices()[0].device_kind.lower()
    except Exception:
        return 1
    return 2 if any(k in kind for k in ("v7", "v4", "v5p")) else 1


def _choose_tile_n(n, c, in_bytes, num_splits, phys_vmem):
    # Sublane pack of the streamed dtype: 8 rows (f32), 16 (bf16), 32 (int8/fp8).
    pack = max(8, 32 // in_bytes)
    # Per-row, per-step VMEM footprint:
    #   double-buffered logits block             : 2 * C * in_bytes
    #   in-kernel f32 temps (exp / where / mul)  : ~3 * C * 4
    #   double-buffered lane-padded target block : 2 * 128 * 4
    per_row = c * (2 * in_bytes + 3 * 4) + 1024
    budget = phys_vmem // 2                        # leave half of VMEM free
    blk_cap = (8 << 20) if phys_vmem >= (96 << 20) else (4 << 20)
    by_blk = blk_cap // max(1, c * in_bytes)
    by_total = budget // per_row
    tile = min(by_blk, by_total, 16384)
    tile = max(pack, (tile // pack) * pack)
    # Don't pad a small batch up to a huge tile.
    rows_per_split = -(-n // num_splits)
    needed = -(-rows_per_split // pack) * pack
    return max(pack, min(tile, needed))


def cross_entropy_loss(x, target, *, epsilon=0.1, tile_n=None, num_splits=None):
    """x: [N, C] float logits (streamed in their HBM dtype), target: [N] ids -> scalar f32."""
    n, c = x.shape
    in_bytes = jnp.dtype(x.dtype).itemsize
    if num_splits is None:
        num_splits = _default_num_splits()
    phys_vmem = _physical_vmem_bytes()
    if tile_n is None:
        tile_n = _choose_tile_n(n, c, in_bytes, num_splits, phys_vmem)
    assert tile_n % 8 == 0

    n_blocks = pl.cdiv(n, tile_n)                  # real (possibly partial) blocks
    inner_tiles = pl.cdiv(n_blocks, num_splits)    # tiles per split

    # Logits are NOT padded: partial final block + in-kernel row mask handle
    # any N.  Only the tiny target vector is padded so its blocks stay in bounds.
    n_tpad = n_blocks * tile_n
    t = target.astype(jnp.int32)
    if n_tpad != n:
        t = jnp.pad(t, (0, n_tpad - n))
    t2d = t.reshape(n_tpad, 1)

    def blk_map(s, i):
        # Clamp fully-out-of-range steps onto the last real block; their rows
        # are masked out by the global_row < n_valid select in the kernel.
        return (jnp.minimum(s * inner_tiles + i, n_blocks - 1), 0)

    kernel = functools.partial(
        _ce_kernel, epsilon=float(epsilon), n_valid=n,
        inner_tiles=inner_tiles, tile_n=tile_n)

    vmem_needed = (2 * tile_n * c * in_bytes        # double-buffered logits block
                   + 3 * tile_n * c * 4             # in-kernel f32 temps
                   + 2 * tile_n * 128 * 4           # lane-padded target block
                   + (2 << 20))                     # slack
    vmem_limit = int(min(phys_vmem - (4 << 20), max(vmem_needed, 32 << 20)))

    partial_sums = pl.pallas_call(
        kernel,
        out_shape=jax.ShapeDtypeStruct((num_splits, 1), jnp.float32),
        grid_spec=pltpu.PrefetchScalarGridSpec(
            num_scalar_prefetch=0,
            grid=(num_splits, inner_tiles),
            in_specs=[
                pl.BlockSpec((tile_n, c), blk_map),
                pl.BlockSpec((tile_n, 1), blk_map),
            ],
            # (1, 1) block over (num_splits, 1): exact fit when num_splits == 1;
            # Mosaic masks the tiny partial output when num_splits == 2
            # (same pattern as the previously verified build).
            out_specs=pl.BlockSpec((1, 1), lambda s, i: (s, 0)),
        ),
        compiler_params=pltpu.CompilerParams(
            dimension_semantics=("parallel", "arbitrary"),
            vmem_limit_bytes=vmem_limit,
        ),
    )(x, t2d)
    return jnp.sum(partial_sums) / n


def _reference(x, target, epsilon=0.1):
    logp = jax.nn.log_softmax(x.astype(jnp.float32), axis=-1)
    nll = -jnp.take_along_axis(logp, target[:, None], axis=-1)[:, 0]
    smooth = -jnp.mean(logp, axis=-1)
    return jnp.mean((1.0 - epsilon) * nll + epsilon * smooth)


if __name__ == "__main__":
    key = jax.random.PRNGKey(0)
    kx, kt = jax.random.split(key)

    # Shapes consistent with the module: [N, C] logits + [N] class ids.
    N, C = 16, 32
    x = jax.random.normal(kx, (N, C), dtype=jnp.float32)
    target = jax.random.randint(kt, (N,), 0, C, dtype=jnp.int32)
    loss = cross_entropy_loss(x, target, epsilon=0.1)
    jax.block_until_ready(loss)
    ref = _reference(x, target, epsilon=0.1)
    assert jnp.allclose(loss, ref, atol=1e-5, rtol=1e-5), (loss, ref)

    # Non-divisible batch exercises the unpadded partial-block + row-mask path.
    N2, C2 = 50, 96
    x2 = jax.random.normal(kx, (N2, C2), dtype=jnp.float32)
    t2 = jax.random.randint(kt, (N2,), 0, C2, dtype=jnp.int32)
    loss2 = cross_entropy_loss(x2, t2, epsilon=0.1)
    jax.block_until_ready(loss2)
    ref2 = _reference(x2, t2, epsilon=0.1)
    assert jnp.allclose(loss2, ref2, atol=1e-5, rtol=1e-5), (loss2, ref2)

    # bf16 logits exercise the dtype-streaming / in-kernel upcast path.
    N3, C3 = 40, 128
    x3 = jax.random.normal(kx, (N3, C3), dtype=jnp.float32).astype(jnp.bfloat16)
    t3 = jax.random.randint(kt, (N3,), 0, C3, dtype=jnp.int32)
    loss3 = cross_entropy_loss(x3, t3, epsilon=0.1)
    jax.block_until_ready(loss3)
    ref3 = _reference(x3, t3, epsilon=0.1)
    assert jnp.allclose(loss3, ref3, atol=5e-4, rtol=5e-4), (loss3, ref3)

    print("KERNEL_OK")
</pallas_src>

<mosaic_0001>
module attributes {stable_mosaic.version = 11 : i64} {
  func.func @_ce_kernel(%arg0: i32, %arg1: i32, %arg2: memref<16x32xf32, #tpu.memory_space<vmem>>, %arg3: memref<16x1xi32, #tpu.memory_space<vmem>>, %arg4: memref<1x1xf32, #tpu.memory_space<vmem>>) attributes {dimension_semantics = [#tpu.dimension_semantics<parallel>, #tpu.dimension_semantics<arbitrary>], iteration_bounds = array<i64: 1, 1>, scalar_prefetch = 0 : i64, scratch_operands = 0 : i64, tpu.core_type = #tpu.core_type<tc>, window_params = [{transform_indices = @transform_0, window_bounds = array<i64: 16, 32>}, {transform_indices = @transform_1, window_bounds = array<i64: 16, 1>}, {transform_indices = @transform_2, window_bounds = array<i64: 1, 1>}]} {
    %c0_i32 = arith.constant 0 : i32
    %0 = arith.cmpi eq, %arg1, %c0_i32 : i32
    %1 = arith.extui %0 : i1 to i32
    %c0_i32_0 = arith.constant 0 : i32
    %2 = arith.cmpi ne, %1, %c0_i32_0 : i32
    scf.if %2 {
      %cst_15 = arith.constant 0.000000e+00 : f32
      %42 = vector.broadcast %cst_15 : f32 to vector<1x1xf32>
      %c0_16 = arith.constant 0 : index
      %c0_17 = arith.constant 0 : index
      %43 = vector.load %arg4[%c0_16, %c0_17] : memref<1x1xf32, #tpu.memory_space<vmem>>, vector<1x1xf32>
      tpu.vector_store %arg4[%c0_16, %c0_17], %42 {strides = array<i32>} : memref<1x1xf32, #tpu.memory_space<vmem>>, vector<1x1xf32>,
    } else {
    }
    %c0 = arith.constant 0 : index
    %c0_1 = arith.constant 0 : index
    %3 = vector.load %arg2[%c0, %c0_1] : memref<16x32xf32, #tpu.memory_space<vmem>>, vector<16x32xf32>
    %c0_2 = arith.constant 0 : index
    %c0_3 = arith.constant 0 : index
    %4 = vector.load %arg3[%c0_2, %c0_3] : memref<16x1xi32, #tpu.memory_space<vmem>>, vector<16x1xi32>
    %cst = arith.constant dense<0xFF800000> : vector<16xf32>
    %5 = vector.multi_reduction <maximumf>, %3, %cst [1] : vector<16x32xf32> to vector<16xf32>
    %6 = vector.shape_cast %5 : vector<16xf32> to vector<16x1xf32>
    %7 = vector.broadcast %6 : vector<16x1xf32> to vector<16x32xf32>
    %8 = arith.subf %3, %7 : vector<16x32xf32>
    %9 = math.exp %8 : vector<16x32xf32>
    %cst_4 = arith.constant dense<0.000000e+00> : vector<16xf32>
    %10 = vector.multi_reduction <add>, %9, %cst_4 [1] : vector<16x32xf32> to vector<16xf32>
    %11 = vector.shape_cast %10 : vector<16xf32> to vector<16x1xf32>
    %12 = math.log %11 : vector<16x1xf32>
    %13 = arith.addf %6, %12 : vector<16x1xf32>
    %14 = tpu.iota {dimensions = array<i32: 1>} : vector<16x32xi32>
    %15 = vector.broadcast %4 : vector<16x1xi32> to vector<16x32xi32>
    %16 = arith.cmpi eq, %14, %15 : vector<16x32xi32>
    %cst_5 = arith.constant 0.903124988 : f32
    %cst_6 = arith.constant 3.125000e-03 : f32
    %17 = vector.broadcast %cst_5 : f32 to vector<16x32xf32>
    %18 = vector.broadcast %cst_6 : f32 to vector<16x32xf32>
    %19 = arith.select %16, %17, %18 : vector<16x32xi1>, vector<16x32xf32>
    %20 = arith.mulf %19, %3 : vector<16x32xf32>
    %cst_7 = arith.constant dense<0.000000e+00> : vector<16xf32>
    %21 = vector.multi_reduction <add>, %20, %cst_7 [1] : vector<16x32xf32> to vector<16xf32>
    %22 = vector.shape_cast %21 : vector<16xf32> to vector<16x1xf32>
    %23 = arith.subf %13, %22 : vector<16x1xf32>
    %24 = tpu.iota {dimensions = array<i32: 0>} : vector<16x1xi32>
    %c1_i32 = arith.constant 1 : i32
    %25 = arith.muli %arg0, %c1_i32 : i32
    %26 = arith.addi %25, %arg1 : i32
    %c16_i32 = arith.constant 16 : i32
    %27 = arith.muli %26, %c16_i32 : i32
    %28 = vector.broadcast %27 : i32 to vector<16x1xi32>
    %29 = arith.addi %28, %24 : vector<16x1xi32>
    %c16_i32_8 = arith.constant 16 : i32
    %30 = vector.broadcast %c16_i32_8 : i32 to vector<16x1xi32>
    %31 = arith.cmpi slt, %29, %30 : vector<16x1xi32>
    %cst_9 = arith.constant 0.000000e+00 : f32
    %32 = vector.broadcast %cst_9 : f32 to vector<16x1xf32>
    %33 = arith.select %31, %23, %32 : vector<16x1xi1>, vector<16x1xf32>
    %c0_10 = arith.constant 0 : index
    %c0_11 = arith.constant 0 : index
    %34 = vector.load %arg4[%c0_10, %c0_11] : memref<1x1xf32, #tpu.memory_space<vmem>>, vector<1x1xf32>
    %35 = vector.shape_cast %33 : vector<16x1xf32> to vector<1x16x1xf32>
    %cst_12 = arith.constant dense<0.000000e+00> : vector<1xf32>
    %36 = vector.multi_reduction <add>, %35, %cst_12 [1, 2] : vector<1x16x1xf32> to vector<1xf32>
    %37 = vector.shape_cast %36 : vector<1xf32> to vector<1x1x1xf32>
    %38 = vector.extract %37[0, 0, 0] : f32 from vector<1x1x1xf32>
    %39 = vector.broadcast %38 : f32 to vector<1x1xf32>
    %40 = arith.addf %34, %39 : vector<1x1xf32>
    %c0_13 = arith.constant 0 : index
    %c0_14 = arith.constant 0 : index
    %41 = vector.load %arg4[%c0_13, %c0_14] : memref<1x1xf32, #tpu.memory_space<vmem>>, vector<1x1xf32>
    tpu.vector_store %arg4[%c0_13, %c0_14], %40 {strides = array<i32>} : memref<1x1xf32, #tpu.memory_space<vmem>>, vector<1x1xf32>,
    return
  }
  func.func @transform_0(%arg0: i32, %arg1: i32) -> (i32, i32) {
    %c1_i32 = arith.constant 1 : i32
    %0 = arith.muli %arg0, %c1_i32 : i32
    %1 = arith.addi %0, %arg1 : i32
    %c0_i32 = arith.constant 0 : i32
    %2 = arith.minsi %1, %c0_i32 : i32
    %c0_i32_0 = arith.constant 0 : i32
    %c0_i32_1 = arith.constant 0 : i32
    return %2, %c0_i32_0 : i32, i32
  }
  func.func @transform_1(%arg0: i32, %arg1: i32) -> (i32, i32) {
    %c1_i32 = arith.constant 1 : i32
    %0 = arith.muli %arg0, %c1_i32 : i32
    %1 = arith.addi %0, %arg1 : i32
    %c0_i32 = arith.constant 0 : i32
    %2 = arith.minsi %1, %c0_i32 : i32
    %c0_i32_0 = arith.constant 0 : i32
    %c0_i32_1 = arith.constant 0 : i32
    return %2, %c0_i32_0 : i32, i32
  }
  func.func @transform_2(%arg0: i32, %arg1: i32) -> (i32, i32) {
    %c0_i32 = arith.constant 0 : i32
    %c0_i32_0 = arith.constant 0 : i32
    return %arg0, %c0_i32 : i32, i32
  }
}

</mosaic_0001>

<llo_original>
// kernel: tpu_custom_call.1
$region0: #{tpu_custom_call.1}
  #allocation0 [shape = 'u32[]', space=smem, size = 0x4, offset = 0x4, fixed_abs, tag = 'smem constant byte address 0x4 - core index']
  #allocation1 [shape = 'u32[144,128]{1,0:T(1,128)}', space=vmem, size = 0x12000, scoped, tag = 'internal scratch']
  %s0 = inlined_call_operand.vmem [shape: f32[16,32], index: 0, kind: input, shape index: {}]
  %s1 = inlined_call_operand.vmem [shape: s32[16,1], index: 1, kind: input, shape index: {}]
  %s2 = inlined_call_operand.hbm [shape: f32[1,1], index: 2, kind: output, shape index: {}]
  %s3 = sld [smem:[#allocation0]]
  $region22: #{tpu_custom_call.1} parent=0
    _
  %s5 = ssub.s32 1, %s3
  %s6 = scalar_select 0, %s5, %s3
  $region1: #{tpu_custom_call.1} parent=0
    #allocation2 [shape = 'u8[512]{0}', space=vmem, size = 0x400, scoped, tag = 'output window, operand 0, single buffered']
    #allocation3 [shape = 's32[1]{0}', space=sflag, size = 0x4, scoped, tag = 'scoped memory for tpu_custom_call.1']
    %7 = vsyncpa [#allocation3], 0
    // Predicated region
    $region2: #{tpu_custom_call.1} parent=1 // pred_check
      _
    $region3: #{tpu_custom_call.1} parent=1 // pred_check_branch
      %9 = sbr.rel (0) target = $region5
    $region4: #{tpu_custom_call.1} parent=1 // pred_region
      %s10 = sadd.s32 0, 0
      %p11 = scmp.lt.s32.totalorder %s10, 0
      %s12 = scalar_select %p11, %s10, 0
      %s13 = smul.u32 2, %s12
      %p14 = scmp.lt.s32.totalorder %s13, 1
      %s15 = scalar_select %p14, %s13, 1
      %s16 = smul.addr %s15, 8
      %s17 = scalar_lea.vmem %s0, %s16
      %s18 = sadd.s32 0, 0
      %p19 = scmp.lt.s32.totalorder %s18, 0
      %s20 = scalar_select %p19, %s18, 0
      %s21 = smul.u32 2, %s20
    $region5: #{tpu_custom_call.1} parent=1 // pred_fallthru
      _
    // Predicated region
    $region6: #{tpu_custom_call.1} parent=1 // pred_check
      _
    $region7: #{tpu_custom_call.1} parent=1 // pred_check_branch
      %23 = sbr.rel (0) target = $region9
    $region8: #{tpu_custom_call.1} parent=1 // pred_region
      %s24 = sadd.s32 0, 0
      %p25 = scmp.lt.s32.totalorder %s24, 0
      %s26 = scalar_select %p25, %s24, 0
      %s27 = smul.u32 2, %s26
      %p28 = scmp.lt.s32.totalorder %s27, 1
      %s29 = scalar_select %p28, %s27, 1
      %s30 = smul.addr %s29, 8
      %s31 = scalar_lea.vmem %s1, %s30
      %s32 = sadd.s32 0, 0
      %p33 = scmp.lt.s32.totalorder %s32, 0
      %s34 = scalar_select %p33, %s32, 0
      %s35 = smul.u32 2, %s34
    $region9: #{tpu_custom_call.1} parent=1 // pred_fallthru
      _
    %s36 = sadd.s32 0, 0
    %p37 = scmp.lt.s32.totalorder %s36, 0
    %s38 = scalar_select %p37, %s36, 0
    %s39 = smul.u32 2, %s38
    %p40 = scmp.lt.s32.totalorder %s39, 1
    %s41 = scalar_select %p40, %s39, 1
    %s42 = smul.addr %s41, 8
    %s43 = scalar_lea.vmem %s0, %s42
    %s44 = sadd.s32 0, 0
    %p45 = scmp.lt.s32.totalorder %s44, 0
    %s46 = scalar_select %p45, %s44, 0
    %s47 = smul.u32 2, %s46
    %p48 = scmp.lt.s32.totalorder %s47, 1
    %s49 = scalar_select %p48, %s47, 1
    %s50 = smul.addr %s49, 8
    %s51 = scalar_lea.vmem %s1, %s50
    %s52 = sadd.s32 0, 0
    %p53 = scmp.lt.s32.totalorder %s52, 0
    %s54 = scalar_select %p53, %s52, 0
    %s55 = smul.u32 2, %s54
    %p56 = scmp.lt.s32.totalorder %s55, 1
    %s57 = scalar_select %p56, %s55, 1
    %s58 = smul.addr %s57, 8
    %s59 = scalar_lea.vmem %s0, %s58
    %s60 = sadd.s32 0, 0
    %p61 = scmp.lt.s32.totalorder %s60, 0
    %s62 = scalar_select %p61, %s60, 0
    %s63 = smul.u32 2, %s62
    %s64 = sadd.s32 0, 0
    %p65 = scmp.lt.s32.totalorder %s64, 0
    %s66 = scalar_select %p65, %s64, 0
    %s67 = smul.u32 2, %s66
    %p68 = scmp.lt.s32.totalorder %s67, 1
    %s69 = scalar_select %p68, %s67, 1
    %s70 = smul.addr %s69, 8
    %s71 = scalar_lea.vmem %s1, %s70
    %s72 = sadd.s32 0, 0
    %p73 = scmp.lt.s32.totalorder %s72, 0
    %s74 = scalar_select %p73, %s72, 0
    %s75 = smul.u32 2, %s74
    %p76 = scmp.eq.s32.totalorder 0, 0
    // Predicated region
    $region10: #{tpu_custom_call.1} parent=1 // pred_check
      %p77 = pneg %p76
    $region11: #{tpu_custom_call.1} parent=1 // pred_check_branch
      %79 = sbr.rel (%p77) target = $region13
    $region12: #{tpu_custom_call.1} parent=1 // pred_region
      %vm80 = vcmask 0
      %81 = vst.msk [vmem:[#allocation2] sm:$0x1] %vm80, 0.0
    $region13: #{tpu_custom_call.1} parent=1 // pred_fallthru
      _
    %v82 = vld [vmem:[%s59] sm:$0xff]
    %v83 = vld [vmem:[%s59 + $0x8] sm:$0xff]
    %v84 = vld [vmem:[%s71] sm:$0xff]
    %v85 = vld [vmem:[%s71 + $0x8] sm:$0xff]
    %vm86 = vcmask 261120
    %v87 = vsel %vm86, %v82, -inf
    %88 = vmax.xlane.f32.xlu0 %v87
    %v89 = vpop.xlane.xlu0 %88
    %v90 = vsel %vm86, %v83, -inf
    %91 = vmax.xlane.f32.xlu0 %v90
    %v92 = vpop.xlane.xlu0 %91
    %v93 = vsub.f32 %v82, %v89
    %v94 = vsub.f32 %v83, %v92
    %v95 = vmul.f32 %v93, 1.442695
    %v96 = vpow.pop %v95
    %v97 = vmul.f32 %v94, 1.442695
    %v98 = vpow.pop %v97
    %v99 = vsel %vm86, %v96, 0.0
    %100 = vadd.xlane.f32.xlu0 %v99
    %v101 = vpop.xlane.xlu0 %100
    %v102 = vsel %vm86, %v98, 0.0
    %103 = vadd.xlane.f32.xlu0 %v102
    %v104 = vpop.xlane.xlu0 %103
    %v105 = vlog2.pop %v101
    %v106 = vmul.f32 %v105, 0.6931472
    %v107 = vlog2.pop %v104
    %v108 = vmul.f32 %v107, 0.6931472
    %v109 = vadd.f32 %v89, %v106
    %v110 = vadd.f32 %v92, %v108
    %v111 = vlaneseq
    %v112 = vand.u32 %v111, 127
    %113 = vset.pattern.permute.xlu0 0
    %114 = vperm.xlu0 %113, %v84
    %v115 = vpop.permute.xlu0 %114
    %116 = vset.pattern.permute.xlu0 0
    %117 = vperm.xlu0 %116, %v85
    %v118 = vpop.permute.xlu0 %117
    %vm119 = vcmp.eq.s32.totalorder %v112, %v115
    %vm120 = vcmp.eq.s32.totalorder %v112, %v118
    %v121 = vsel %vm119, 0.903125, 0.003125
    %v122 = vsel %vm120, 0.903125, 0.003125
    %v123 = vmul.f32 %v121, %v82
    %v124 = vmul.f32 %v122, %v83
    %v125 = vsel %vm86, %v123, 0.0
    %126 = vadd.xlane.f32.xlu0 %v125
    %v127 = vpop.xlane.xlu0 %126
    %v128 = vsel %vm86, %v124, 0.0
    %129 = vadd.xlane.f32.xlu0 %v128
    %v130 = vpop.xlane.xlu0 %129
    %v131 = vsub.f32 %v109, %v127
    %v132 = vsub.f32 %v110, %v130
    %v133 = vlaneseq
    %v134 = vshrl.u32 %v133, 7
    %v135 = vadd.s32 %v134, 8
    %s136 = sadd.s32 0, 0
    %s137 = smul.u32 %s136, 16
    %v138 = vstv %s137
    %v139 = vadd.s32 %v138, %v134
    %v140 = vadd.s32 %v138, %v135
    %vm141 = vcmp.lt.s32.totalorder %v139, 16
    %vm142 = vcmp.lt.s32.totalorder %v140, 16
    %v143 = vsel %vm141, %v131, 0.0
    %v144 = vsel %vm142, %v132, 0.0
    %v145 = vld [vmem:[#allocation2] sm:$0x1]
    %vm146 = vcmask 7168
    %v147 = vsel %vm146, %v143, 0.0
    %v148 = vsel %vm146, %v144, 0.0
    %v149 = vadd.f32 %v147, %v148
    %150 = vadd.xlane.f32.xlu0 %v149
    %v151 = vpop.xlane.xlu0 %150
    %v152 = vrot.slane %v151, 4
    %v153 = vadd.f32 %v151, %v152
    %v154 = vrot.slane %v153, 2
    %v155 = vadd.f32 %v153, %v154
    %v156 = vrot.slane %v155, 1
    %v157 = vadd.f32 %v155, %v156
    %s158 = vtos %v157
    %v159 = vstv %s158
    %v160 = vadd.f32 %v145, %v159
    %vm161 = vcmask 0
    %162 = vst.msk [vmem:[#allocation2] sm:$0x1] %vm161, %v160
    // Predicated region
    $region14: #{tpu_custom_call.1} parent=1 // pred_check
      _
    $region15: #{tpu_custom_call.1} parent=1 // pred_check_branch
      %164 = sbr.rel (0) target = $region17
    $region16: #{tpu_custom_call.1} parent=1 // pred_region
      %s166 = ssub.s32 16, 16
      %167 = vsyncadd [#allocation3], %s166
      %s169 = sshll.u32 [#allocation2], 4
      %s170 = int_to_ptr.vmem [resolvable:$true] %s169
      %172 = dma.vmem_to_hbm [thread:$0]  %s170, 16, %s2, [#allocation3]
    $region17: #{tpu_custom_call.1} parent=1 // pred_fallthru
      _
    // Predicated region
    $region18: #{tpu_custom_call.1} parent=1 // pred_check
      _
    $region19: #{tpu_custom_call.1} parent=1 // pred_check_branch
      %174 = sbr.rel (0) target = $region21
    $region20: #{tpu_custom_call.1} parent=1 // pred_region
      %175 = dma.done [#allocation3], 16
    $region21: #{tpu_custom_call.1} parent=1 // pred_fallthru
      _
    %176 = vsyncpa [#allocation3], 1

</llo_original>
